<compile_context>
chip_gen: v7x
topology: tpu7x:2x2x1
jax: 0.10.0
libtpu: 0.0.40
codegen_flags: <defaults>
</compile_context>

<pallas_src>
import math
from functools import partial

import jax
import jax.numpy as jnp
from jax.experimental import pallas as pl
from jax.experimental.pallas import tpu as pltpu


def _round_up(n, m):
    return ((n + m - 1) // m) * m


# ----------------------------------------------------------------------------
# Fused AttentionHead kernel: Q/K/V projections + scaled dot-product attention
# ----------------------------------------------------------------------------
def attention_head_kernel(xq_ref, xk_ref, xv_ref,
                          wq_ref, bq_ref, wk_ref, bk_ref, wv_ref, bv_ref,
                          out_ref, *, scale):
    xq = xq_ref[...]
    xk = xk_ref[...]
    xv = xv_ref[...]

    # Fused Q / K / V projections (weights stored as (in, out)).
    q = jnp.dot(xq, wq_ref[...], preferred_element_type=jnp.float32) + bq_ref[...]
    k = jnp.dot(xk, wk_ref[...], preferred_element_type=jnp.float32) + bk_ref[...]
    v = jnp.dot(xv, wv_ref[...], preferred_element_type=jnp.float32) + bv_ref[...]

    # logits = q @ k^T without materializing the transpose: contract q dim 1
    # against k dim 1 so the MXU consumes K un-transposed (no XLU relayout).
    logits = jax.lax.dot_general(
        q, k, (((1,), (1,)), ((), ())),
        preferred_element_type=jnp.float32) * scale
    # NOTE: `mask` is None in AttentionHead.forward, so no masked_fill path.

    # Numerically-stable softmax; divide moved to the EUP reciprocal slot.
    m = jnp.max(logits, axis=-1, keepdims=True)
    e = jnp.exp(logits - m)
    inv_denom = pl.reciprocal(jnp.sum(e, axis=-1, keepdims=True), approx=True)
    scores = e * inv_denom

    # Lane-dense (multiple-of-128 last dim) unmasked store.
    out_ref[...] = jnp.dot(scores, v, preferred_element_type=jnp.float32)


_VMEM = pl.BlockSpec(memory_space=pltpu.MemorySpace.VMEM)


def attention_head(emb_q, emb_k, emb_v, params, dim_qk, dim_v):
    """Single fused pallas_call; returns (seq_q, dim_v) f32."""
    wq, bq, wk, bk, wv, bv = params  # already lane-padded on host
    sq = emb_q.shape[0]
    dv_pad = wv.shape[1]
    # Scale uses the TRUE dim_qk (padded K/Q columns are zero and do not
    # contribute to q @ k^T).
    scale = 1.0 / math.sqrt(dim_qk)

    out_padded = pl.pallas_call(
        partial(attention_head_kernel, scale=scale),
        out_shape=jax.ShapeDtypeStruct((sq, dv_pad), jnp.float32),
        in_specs=[_VMEM] * 9,
        out_specs=_VMEM,
    )(emb_q, emb_k, emb_v, wq, bq, wk, bk, wv, bv)
    # Strip the zero lane-padding outside the kernel.
    return out_padded[:, :dim_v]
    # TODO(synk): for seq_q beyond toy sizes, add a query-row grid with
    # dimension_semantics=("parallel",) (v7x dual-TensorCore) and bf16 MXU
    # operands; unnecessary at (8, 32).


# ----------------------------------------------------------------------------
# Host-side parameter init (torch nn.Linear-style) + lane padding
# ----------------------------------------------------------------------------
def _linear_init(key, din, dout):
    k_w, k_b = jax.random.split(key)
    bound = 1.0 / math.sqrt(din)
    w = jax.random.uniform(k_w, (din, dout), jnp.float32, -bound, bound)
    b = jax.random.uniform(k_b, (1, dout), jnp.float32, -bound, bound)
    return w, b


def _pad_lanes(w, b, target):
    dout = w.shape[1]
    if target > dout:
        w = jnp.pad(w, ((0, 0), (0, target - dout)))
        b = jnp.pad(b, ((0, 0), (0, target - dout)))
    return w, b


def init_attention_head_params(key, dim_in, dim_qk, dim_v):
    kq, kk, kv = jax.random.split(key, 3)
    wq, bq = _linear_init(kq, dim_in, dim_qk)
    wk, bk = _linear_init(kk, dim_in, dim_qk)
    wv, bv = _linear_init(kv, dim_in, dim_v)
    # Zero-pad output lanes to a multiple of 128 so every in-kernel store is an
    # unmasked, lane-dense vst (padded Q/K columns are zero -> logits unchanged;
    # padded V columns are zero -> sliced off after the call).
    qk_pad = _round_up(dim_qk, 128)
    v_pad = _round_up(dim_v, 128)
    wq, bq = _pad_lanes(wq, bq, qk_pad)
    wk, bk = _pad_lanes(wk, bk, qk_pad)
    wv, bv = _pad_lanes(wv, bv, v_pad)
    return (wq, bq, wk, bk, wv, bv)


# ----------------------------------------------------------------------------
# Plain-JAX reference (for a sanity check against the kernel)
# ----------------------------------------------------------------------------
def reference_forward(emb_q, emb_k, emb_v, params, dim_qk, dim_v):
    wq, bq, wk, bk, wv, bv = params
    q = emb_q @ wq[:, :dim_qk] + bq[:, :dim_qk]
    k = emb_k @ wk[:, :dim_qk] + bk[:, :dim_qk]
    v = emb_v @ wv[:, :dim_v] + bv[:, :dim_v]
    logits = (q @ k.T) / math.sqrt(dim_qk)
    scores = jax.nn.softmax(logits, axis=-1)
    return scores @ v


# ----------------------------------------------------------------------------
if __name__ == "__main__":
    SEQ, DIM_IN, DIM_QK, DIM_V = 8, 32, 16, 32

    key = jax.random.PRNGKey(0)
    k_q, k_k, k_v, k_par = jax.random.split(key, 4)
    emb_for_queries = jax.random.normal(k_q, (SEQ, DIM_IN), jnp.float32)
    emb_for_keys = jax.random.normal(k_k, (SEQ, DIM_IN), jnp.float32)
    emb_for_values = jax.random.normal(k_v, (SEQ, DIM_IN), jnp.float32)

    params = init_attention_head_params(k_par, DIM_IN, DIM_QK, DIM_V)

    out = attention_head(emb_for_queries, emb_for_keys, emb_for_values,
                         params, DIM_QK, DIM_V)
    jax.block_until_ready(out)

    assert out.shape == (SEQ, DIM_V)
    assert bool(jnp.all(jnp.isfinite(out)))

    ref = reference_forward(emb_for_queries, emb_for_keys, emb_for_values,
                            params, DIM_QK, DIM_V)
    # approx EUP reciprocal in softmax -> tiny deviation from exact divide
    assert bool(jnp.allclose(out, ref, rtol=1e-2, atol=1e-2))

    print("KERNEL_OK")
</pallas_src>

<mosaic_0001>
module attributes {stable_mosaic.version = 11 : i64} {
  func.func @attention_head_kernel(%arg0: memref<8x32xf32, #tpu.memory_space<vmem>>, %arg1: memref<8x32xf32, #tpu.memory_space<vmem>>, %arg2: memref<8x32xf32, #tpu.memory_space<vmem>>, %arg3: memref<32x128xf32, #tpu.memory_space<vmem>>, %arg4: memref<1x128xf32, #tpu.memory_space<vmem>>, %arg5: memref<32x128xf32, #tpu.memory_space<vmem>>, %arg6: memref<1x128xf32, #tpu.memory_space<vmem>>, %arg7: memref<32x128xf32, #tpu.memory_space<vmem>>, %arg8: memref<1x128xf32, #tpu.memory_space<vmem>>, %arg9: memref<8x128xf32, #tpu.memory_space<vmem>>) attributes {dimension_semantics = [], scalar_prefetch = 0 : i64, scratch_operands = 0 : i64, tpu.core_type = #tpu.core_type<tc>} {
    %c0 = arith.constant 0 : index
    %c0_0 = arith.constant 0 : index
    %0 = vector.load %arg0[%c0, %c0_0] : memref<8x32xf32, #tpu.memory_space<vmem>>, vector<8x32xf32>
    %c0_1 = arith.constant 0 : index
    %c0_2 = arith.constant 0 : index
    %1 = vector.load %arg1[%c0_1, %c0_2] : memref<8x32xf32, #tpu.memory_space<vmem>>, vector<8x32xf32>
    %c0_3 = arith.constant 0 : index
    %c0_4 = arith.constant 0 : index
    %2 = vector.load %arg2[%c0_3, %c0_4] : memref<8x32xf32, #tpu.memory_space<vmem>>, vector<8x32xf32>
    %c0_5 = arith.constant 0 : index
    %c0_6 = arith.constant 0 : index
    %3 = vector.load %arg3[%c0_5, %c0_6] : memref<32x128xf32, #tpu.memory_space<vmem>>, vector<32x128xf32>
    %cst = arith.constant dense<0.000000e+00> : vector<8x128xf32>
    %4 = tpu.matmul %0, %3, %cst {dimension_numbers = #tpu.dot_dimension_numbers<[1], [0], [0], [1], [0, 0, 1, 1], [], []>} : vector<8x32xf32>, vector<32x128xf32>, vector<8x128xf32> -> vector<8x128xf32>
    %c0_7 = arith.constant 0 : index
    %c0_8 = arith.constant 0 : index
    %5 = vector.load %arg4[%c0_7, %c0_8] : memref<1x128xf32, #tpu.memory_space<vmem>>, vector<1x128xf32>
    %6 = vector.broadcast %5 : vector<1x128xf32> to vector<8x128xf32>
    %7 = arith.addf %4, %6 : vector<8x128xf32>
    %c0_9 = arith.constant 0 : index
    %c0_10 = arith.constant 0 : index
    %8 = vector.load %arg5[%c0_9, %c0_10] : memref<32x128xf32, #tpu.memory_space<vmem>>, vector<32x128xf32>
    %cst_11 = arith.constant dense<0.000000e+00> : vector<8x128xf32>
    %9 = tpu.matmul %1, %8, %cst_11 {dimension_numbers = #tpu.dot_dimension_numbers<[1], [0], [0], [1], [0, 0, 1, 1], [], []>} : vector<8x32xf32>, vector<32x128xf32>, vector<8x128xf32> -> vector<8x128xf32>
    %c0_12 = arith.constant 0 : index
    %c0_13 = arith.constant 0 : index
    %10 = vector.load %arg6[%c0_12, %c0_13] : memref<1x128xf32, #tpu.memory_space<vmem>>, vector<1x128xf32>
    %11 = vector.broadcast %10 : vector<1x128xf32> to vector<8x128xf32>
    %12 = arith.addf %9, %11 : vector<8x128xf32>
    %c0_14 = arith.constant 0 : index
    %c0_15 = arith.constant 0 : index
    %13 = vector.load %arg7[%c0_14, %c0_15] : memref<32x128xf32, #tpu.memory_space<vmem>>, vector<32x128xf32>
    %cst_16 = arith.constant dense<0.000000e+00> : vector<8x128xf32>
    %14 = tpu.matmul %2, %13, %cst_16 {dimension_numbers = #tpu.dot_dimension_numbers<[1], [0], [0], [1], [0, 0, 1, 1], [], []>} : vector<8x32xf32>, vector<32x128xf32>, vector<8x128xf32> -> vector<8x128xf32>
    %c0_17 = arith.constant 0 : index
    %c0_18 = arith.constant 0 : index
    %15 = vector.load %arg8[%c0_17, %c0_18] : memref<1x128xf32, #tpu.memory_space<vmem>>, vector<1x128xf32>
    %16 = vector.broadcast %15 : vector<1x128xf32> to vector<8x128xf32>
    %17 = arith.addf %14, %16 : vector<8x128xf32>
    %cst_19 = arith.constant dense<0.000000e+00> : vector<8x8xf32>
    %18 = tpu.matmul %7, %12, %cst_19 {dimension_numbers = #tpu.dot_dimension_numbers<[1], [1], [0], [0], [0, 0, 1, 0], [], []>} : vector<8x128xf32>, vector<8x128xf32>, vector<8x8xf32> -> vector<8x8xf32>
    %cst_20 = arith.constant 2.500000e-01 : f32
    %19 = vector.broadcast %cst_20 : f32 to vector<8x8xf32>
    %20 = arith.mulf %18, %19 : vector<8x8xf32>
    %cst_21 = arith.constant dense<0xFF800000> : vector<8xf32>
    %21 = vector.multi_reduction <maximumf>, %20, %cst_21 [1] : vector<8x8xf32> to vector<8xf32>
    %22 = vector.shape_cast %21 : vector<8xf32> to vector<8x1xf32>
    %23 = vector.broadcast %22 : vector<8x1xf32> to vector<8x8xf32>
    %24 = arith.subf %20, %23 : vector<8x8xf32>
    %25 = math.exp %24 : vector<8x8xf32>
    %cst_22 = arith.constant dense<0.000000e+00> : vector<8xf32>
    %26 = vector.multi_reduction <add>, %25, %cst_22 [1] : vector<8x8xf32> to vector<8xf32>
    %27 = vector.shape_cast %26 : vector<8xf32> to vector<8x1xf32>
    %28 = tpu.reciprocal %27 {approx = true} : vector<8x1xf32> -> vector<8x1xf32>
    %29 = vector.broadcast %28 : vector<8x1xf32> to vector<8x8xf32>
    %30 = arith.mulf %25, %29 : vector<8x8xf32>
    %cst_23 = arith.constant dense<0.000000e+00> : vector<8x128xf32>
    %31 = tpu.matmul %30, %17, %cst_23 {dimension_numbers = #tpu.dot_dimension_numbers<[1], [0], [0], [1], [0, 0, 1, 1], [], []>} : vector<8x8xf32>, vector<8x128xf32>, vector<8x128xf32> -> vector<8x128xf32>
    %c0_24 = arith.constant 0 : index
    %c0_25 = arith.constant 0 : index
    %32 = vector.load %arg9[%c0_24, %c0_25] : memref<8x128xf32, #tpu.memory_space<vmem>>, vector<8x128xf32>
    tpu.vector_store %arg9[%c0_24, %c0_25], %31 {strides = array<i32>} : memref<8x128xf32, #tpu.memory_space<vmem>>, vector<8x128xf32>,
    return
  }
}

</mosaic_0001>

<llo_original>
// kernel: tpu_custom_call.1
$region0: #{tpu_custom_call.1}
  #allocation0 [shape = 'u32[]', space=smem, size = 0x4, offset = 0x4, fixed_abs, tag = 'smem constant byte address 0x4 - core index']
  #allocation1 [shape = 'u32[144,128]{1,0:T(1,128)}', space=vmem, size = 0x12000, scoped, tag = 'internal scratch']
  %s0 = inlined_call_operand.hbm [shape: f32[8,32], index: 0, kind: input, shape index: {}]
  %s1 = inlined_call_operand.hbm [shape: f32[8,32], index: 1, kind: input, shape index: {}]
  %s2 = inlined_call_operand.hbm [shape: f32[8,32], index: 2, kind: input, shape index: {}]
  %s3 = inlined_call_operand.hbm [shape: f32[32,128], index: 3, kind: input, shape index: {}]
  %s4 = inlined_call_operand.vmem [shape: f32[1,128], index: 4, kind: input, shape index: {}]
  %s5 = inlined_call_operand.hbm [shape: f32[32,128], index: 5, kind: input, shape index: {}]
  %s6 = inlined_call_operand.vmem [shape: f32[1,128], index: 6, kind: input, shape index: {}]
  %s7 = inlined_call_operand.hbm [shape: f32[32,128], index: 7, kind: input, shape index: {}]
  %s8 = inlined_call_operand.vmem [shape: f32[1,128], index: 8, kind: input, shape index: {}]
  %s9 = inlined_call_operand.hbm [shape: f32[8,128], index: 9, kind: output, shape index: {}]
  %s10 = sld [smem:[#allocation0]]
  $region70: #{tpu_custom_call.1} parent=0
    _
  %s12 = ssub.s32 1, %s10
  %s13 = scalar_select 0, %s12, %s10
  $region1: #{tpu_custom_call.1} parent=0
    #allocation2 [shape = 'u8[4096]{0}', space=vmem, size = 0x1000, scoped, tag = 'input window, operand 0, single buffered']
    #allocation3 [shape = 's32[1]{0}', space=sflag, size = 0x4, scoped, tag = 'scoped memory for tpu_custom_call.1']
    #allocation4 [shape = 's32[1]{0}', space=sflag, size = 0x4, scoped, tag = 'scoped memory for tpu_custom_call.1']
    #allocation5 [shape = 'u8[4096]{0}', space=vmem, size = 0x1000, scoped, tag = 'input window, operand 1, single buffered']
    #allocation6 [shape = 's32[1]{0}', space=sflag, size = 0x4, scoped, tag = 'scoped memory for tpu_custom_call.1']
    #allocation7 [shape = 'u8[4096]{0}', space=vmem, size = 0x1000, scoped, tag = 'input window, operand 2, single buffered']
    #allocation8 [shape = 'u8[16384]{0}', space=vmem, size = 0x4000, scoped, tag = 'input window, operand 3, single buffered']
    #allocation9 [shape = 's32[1]{0}', space=sflag, size = 0x4, scoped, tag = 'scoped memory for tpu_custom_call.1']
    #allocation10 [shape = 'u8[16384]{0}', space=vmem, size = 0x4000, scoped, tag = 'input window, operand 5, single buffered']
    #allocation11 [shape = 'u8[16384]{0}', space=vmem, size = 0x4000, scoped, tag = 'input window, operand 7, single buffered']
    #allocation12 [shape = 's32[1]{0}', space=sflag, size = 0x4, scoped, tag = 'scoped memory for tpu_custom_call.1']
    #allocation13 [shape = 'u8[4096]{0}', space=vmem, size = 0x1000, scoped, tag = 'output window, operand 0, single buffered']
    %14 = vsyncpa [#allocation3], 0
    %15 = vsyncpa [#allocation6], 0
    %16 = vsyncpa [#allocation9], 0
    %17 = vsyncpa [#allocation12], 0
    %18 = vsyncpa [#allocation4], 0
    // Predicated region
    $region2: #{tpu_custom_call.1} parent=1 // pred_check
      _
    $region3: #{tpu_custom_call.1} parent=1 // pred_check_branch
      %20 = sbr.rel (0) target = $region5
    $region4: #{tpu_custom_call.1} parent=1 // pred_region
      %s22 = ssub.s32 128, 128
      %23 = vsyncadd [#allocation3], %s22
      %s25 = sshll.u32 [#allocation2], 4
      %s26 = int_to_ptr.vmem [resolvable:$true] %s25
      %28 = dma.hbm_to_vmem [thread:$0]  %s0, 128, %s26, [#allocation3]
    $region5: #{tpu_custom_call.1} parent=1 // pred_fallthru
      _
    // Predicated region
    $region6: #{tpu_custom_call.1} parent=1 // pred_check
      _
    $region7: #{tpu_custom_call.1} parent=1 // pred_check_branch
      %30 = sbr.rel (0) target = $region9
    $region8: #{tpu_custom_call.1} parent=1 // pred_region
      %s32 = ssub.s32 128, 128
      %33 = vsyncadd [#allocation6], %s32
      %s35 = sshll.u32 [#allocation5], 4
      %s36 = int_to_ptr.vmem [resolvable:$true] %s35
      %38 = dma.hbm_to_vmem [thread:$0]  %s1, 128, %s36, [#allocation6]
    $region9: #{tpu_custom_call.1} parent=1 // pred_fallthru
      _
    // Predicated region
    $region10: #{tpu_custom_call.1} parent=1 // pred_check
      _
    $region11: #{tpu_custom_call.1} parent=1 // pred_check_branch
      %40 = sbr.rel (0) target = $region13
    $region12: #{tpu_custom_call.1} parent=1 // pred_region
      %s42 = ssub.s32 128, 128
      %43 = vsyncadd [#allocation6], %s42
      %s45 = sshll.u32 [#allocation7], 4
      %s46 = int_to_ptr.vmem [resolvable:$true] %s45
      %48 = dma.hbm_to_vmem [thread:$0]  %s2, 128, %s46, [#allocation6]
    $region13: #{tpu_custom_call.1} parent=1 // pred_fallthru
      _
    // Predicated region
    $region14: #{tpu_custom_call.1} parent=1 // pred_check
      _
    $region15: #{tpu_custom_call.1} parent=1 // pred_check_branch
      %50 = sbr.rel (0) target = $region17
    $region16: #{tpu_custom_call.1} parent=1 // pred_region
      %s52 = ssub.s32 512, 512
      %53 = vsyncadd [#allocation9], %s52
      %s54 = sshll.u32 [#allocation8], 4
      %s55 = int_to_ptr.vmem [resolvable:$true] %s54
      %60 = dma.hbm_to_vmem [thread:$0]  %s3, 512, %s55, [#allocation9], 128, 128, 8
    $region17: #{tpu_custom_call.1} parent=1 // pred_fallthru
      _
    // Predicated region
    $region18: #{tpu_custom_call.1} parent=1 // pred_check
      _
    $region19: #{tpu_custom_call.1} parent=1 // pred_check_branch
      %62 = sbr.rel (0) target = $region21
    $region20: #{tpu_custom_call.1} parent=1 // pred_region
      _
    $region21: #{tpu_custom_call.1} parent=1 // pred_fallthru
      _
    // Predicated region
    $region22: #{tpu_custom_call.1} parent=1 // pred_check
      _
    $region23: #{tpu_custom_call.1} parent=1 // pred_check_branch
      %64 = sbr.rel (0) target = $region25
    $region24: #{tpu_custom_call.1} parent=1 // pred_region
      %s66 = ssub.s32 512, 512
      %67 = vsyncadd [#allocation9], %s66
      %s68 = sshll.u32 [#allocation10], 4
      %s69 = int_to_ptr.vmem [resolvable:$true] %s68
      %74 = dma.hbm_to_vmem [thread:$0]  %s5, 512, %s69, [#allocation9], 128, 128, 8
    $region25: #{tpu_custom_call.1} parent=1 // pred_fallthru
      _
    // Predicated region
    $region26: #{tpu_custom_call.1} parent=1 // pred_check
      _
    $region27: #{tpu_custom_call.1} parent=1 // pred_check_branch
      %76 = sbr.rel (0) target = $region29
    $region28: #{tpu_custom_call.1} parent=1 // pred_region
      _
    $region29: #{tpu_custom_call.1} parent=1 // pred_fallthru
      _
    // Predicated region
    $region30: #{tpu_custom_call.1} parent=1 // pred_check
      _
    $region31: #{tpu_custom_call.1} parent=1 // pred_check_branch
      %78 = sbr.rel (0) target = $region33
    $region32: #{tpu_custom_call.1} parent=1 // pred_region
      %s80 = ssub.s32 512, 512
      %81 = vsyncadd [#allocation12], %s80
      %s82 = sshll.u32 [#allocation11], 4
      %s83 = int_to_ptr.vmem [resolvable:$true] %s82
      %88 = dma.hbm_to_vmem [thread:$0]  %s7, 512, %s83, [#allocation12], 128, 128, 8
    $region33: #{tpu_custom_call.1} parent=1 // pred_fallthru
      _
    // Predicated region
    $region34: #{tpu_custom_call.1} parent=1 // pred_check
      _
    $region35: #{tpu_custom_call.1} parent=1 // pred_check_branch
      %90 = sbr.rel (0) target = $region37
    $region36: #{tpu_custom_call.1} parent=1 // pred_region
      _
    $region37: #{tpu_custom_call.1} parent=1 // pred_fallthru
      _
    // Predicated region
    $region38: #{tpu_custom_call.1} parent=1 // pred_check
      _
    $region39: #{tpu_custom_call.1} parent=1 // pred_check_branch
      %92 = sbr.rel (0) target = $region41
    $region40: #{tpu_custom_call.1} parent=1 // pred_region
      %93 = dma.done [#allocation3], 128
    $region41: #{tpu_custom_call.1} parent=1 // pred_fallthru
      _
    // Predicated region
    $region42: #{tpu_custom_call.1} parent=1 // pred_check
      _
    $region43: #{tpu_custom_call.1} parent=1 // pred_check_branch
      %95 = sbr.rel (0) target = $region45
    $region44: #{tpu_custom_call.1} parent=1 // pred_region
      %96 = dma.done [#allocation6], 128
    $region45: #{tpu_custom_call.1} parent=1 // pred_fallthru
      _
    // Predicated region
    $region46: #{tpu_custom_call.1} parent=1 // pred_check
      _
    $region47: #{tpu_custom_call.1} parent=1 // pred_check_branch
      %98 = sbr.rel (0) target = $region49
    $region48: #{tpu_custom_call.1} parent=1 // pred_region
      %99 = dma.done [#allocation6], 128
    $region49: #{tpu_custom_call.1} parent=1 // pred_fallthru
      _
    // Predicated region
    $region50: #{tpu_custom_call.1} parent=1 // pred_check
      _
    $region51: #{tpu_custom_call.1} parent=1 // pred_check_branch
      %101 = sbr.rel (0) target = $region53
    $region52: #{tpu_custom_call.1} parent=1 // pred_region
      %102 = dma.done [#allocation9], 512
    $region53: #{tpu_custom_call.1} parent=1 // pred_fallthru
      _
    // Predicated region
    $region54: #{tpu_custom_call.1} parent=1 // pred_check
      _
    $region55: #{tpu_custom_call.1} parent=1 // pred_check_branch
      %104 = sbr.rel (0) target = $region57
    $region56: #{tpu_custom_call.1} parent=1 // pred_region
      %105 = dma.done [#allocation9], 512
    $region57: #{tpu_custom_call.1} parent=1 // pred_fallthru
      _
    // Predicated region
    $region58: #{tpu_custom_call.1} parent=1 // pred_check
      _
    $region59: #{tpu_custom_call.1} parent=1 // pred_check_branch
      %107 = sbr.rel (0) target = $region61
    $region60: #{tpu_custom_call.1} parent=1 // pred_region
      %108 = dma.done [#allocation12], 512
    $region61: #{tpu_custom_call.1} parent=1 // pred_fallthru
      _
    %v109 = vld [vmem:[#allocation2] sm:$0xff]
    %v110 = vld [vmem:[#allocation5] sm:$0xff]
    %v111 = vld [vmem:[#allocation7] sm:$0xff]
    %v112 = vld [vmem:[#allocation8] sm:$0xff]
    %v113 = vld [vmem:[#allocation8 + $0x8] sm:$0xff]
    %v114 = vld [vmem:[#allocation8 + $0x10] sm:$0xff]
    %v115 = vld [vmem:[#allocation8 + $0x18] sm:$0xff]
    %v116 = vld [vmem:[%s4] sm:$0x1]
    %v118 = vlaneseq
    %v119 = vshrl.u32 %v118, 7
    %v120 = vsub.s32 0, %v119
    %v121 = vrot.slane %v116, %v120
    %vm123 = vcmask 261120
    %v125 = vsel %vm123, %v109, 0
    %127 = vmatprep.subr.mxu0 0.0
    %128 = vmatpush1.msra.mxu0 %v112
    %129 = vmatprep.subr.mxu0 0.0
    %130 = vmatpush1.msra.mxu0 %v113
    %131 = vmatprep.subr.mxu0 0.0
    %132 = vmatpush1.msra.mxu0 %v114
    %133 = vmatprep.subr.mxu0 0.0
    %134 = vmatpush1.msra.mxu0 %v115
    %135 = vmatprep.subr.mxu0 0.0
    %136 = vmatpush1.msra.mxu0 0.0
    %137 = vmatprep.subr.mxu0 0.0
    %138 = vmatpush1.msra.mxu0 0.0
    %139 = vmatprep.subr.mxu0 0.0
    %140 = vmatpush1.msra.mxu0 0.0
    %141 = vmatprep.subr.mxu0 0.0
    %142 = vmatpush1.msra.mxu0 0.0
    %143 = vmatprep.subr.mxu0 0.0
    %144 = vmatpush1.msra.mxu0 0.0
    %145 = vmatprep.subr.mxu0 0.0
    %146 = vmatpush1.msra.mxu0 0.0
    %147 = vmatprep.subr.mxu0 0.0
    %148 = vmatpush1.msra.mxu0 0.0
    %149 = vmatprep.subr.mxu0 0.0
    %150 = vmatpush1.msra.mxu0 0.0
    %151 = vmatprep.subr.mxu0 0.0
    %152 = vmatpush1.msra.mxu0 0.0
    %153 = vmatprep.subr.mxu0 0.0
    %154 = vmatpush1.msra.mxu0 0.0
    %155 = vmatprep.subr.mxu0 0.0
    %156 = vmatpush1.msra.mxu0 0.0
    %157 = vmatprep.subr.mxu0 0.0
    %158 = vmatpush1.msra.mxu0 0.0
    %159 = vmatprep.subr.mxu0 0.0
    %160 = vmatpush1.msra.mxu0 0.0
    %161 = vmatprep.subr.mxu0 0.0
    %162 = vmatpush1.msra.mxu0 0.0
    %163 = vmatprep.subr.mxu0 0.0
    %164 = vmatpush1.msra.mxu0 0.0
    %165 = vmatprep.subr.mxu0 0.0
    %166 = vmatpush1.msra.mxu0 0.0
    %167 = vmatprep.subr.mxu0 0.0
    %168 = vmatpush1.msra.mxu0 0.0
    %169 = vmatprep.subr.mxu0 0.0
    %170 = vmatpush1.msra.mxu0 0.0
    %171 = vmatprep.subr.mxu0 0.0
    %172 = vmatpush1.msra.mxu0 0.0
    %173 = vmatprep.subr.mxu0 0.0
    %174 = vmatpush1.msra.mxu0 0.0
    %175 = vmatprep.subr.mxu0 0.0
    %176 = vmatpush1.msra.mxu0 0.0
    %177 = vmatprep.subr.mxu0 0.0
    %178 = vmatpush1.msra.mxu0 0.0
    %179 = vmatprep.subr.mxu0 0.0
    %180 = vmatpush1.msra.mxu0 0.0
    %181 = vmatprep.subr.mxu0 0.0
    %182 = vmatpush1.msra.mxu0 0.0
    %183 = vmatprep.subr.mxu0 0.0
    %184 = vmatpush1.msra.mxu0 0.0
    %185 = vmatprep.subr.mxu0 0.0
    %186 = vmatpush1.msra.mxu0 0.0
    %187 = vmatprep.subr.mxu0 0.0
    %188 = vmatpush1.msra.mxu0 0.0
    %189 = vmatprep.subr.mxu0 0.0
    %190 = vmatpush1.msra.mxu0 0.0
    %191 = vmatprep.mubr.f32.mxu0 0.0
    %192 = vmatmul.mubr.f32.gmra.mrb[0].mxu0 %v125
    %v193 = vpop.f32.mrb[0].mxu0
    %v194 = vadd.f32 %v121, %v193
    %v195 = vpop.f32.mrb[0].mxu0
    %196 = vdwg.mxu0
    %v197 = vld [vmem:[#allocation10] sm:$0xff]
    %v198 = vld [vmem:[#allocation10 + $0x8] sm:$0xff]
    %v199 = vld [vmem:[#allocation10 + $0x10] sm:$0xff]
    %v200 = vld [vmem:[#allocation10 + $0x18] sm:$0xff]
    %v201 = vld [vmem:[%s6] sm:$0x1]
    %v203 = vlaneseq
    %v204 = vshrl.u32 %v203, 7
    %v205 = vsub.s32 0, %v204
    %v206 = vrot.slane %v201, %v205
    %v209 = vsel %vm123, %v110, 0
    %211 = vmatprep.subr.mxu0 0.0
    %212 = vmatpush1.msra.mxu0 %v197
    %213 = vmatprep.subr.mxu0 0.0
    %214 = vmatpush1.msra.mxu0 %v198
    %215 = vmatprep.subr.mxu0 0.0
    %216 = vmatpush1.msra.mxu0 %v199
    %217 = vmatprep.subr.mxu0 0.0
    %218 = vmatpush1.msra.mxu0 %v200
    %219 = vmatprep.subr.mxu0 0.0
    %220 = vmatpush1.msra.mxu0 0.0
    %221 = vmatprep.subr.mxu0 0.0
    %222 = vmatpush1.msra.mxu0 0.0
    %223 = vmatprep.subr.mxu0 0.0
    %224 = vmatpush1.msra.mxu0 0.0
    %225 = vmatprep.subr.mxu0 0.0
    %226 = vmatpush1.msra.mxu0 0.0
    %227 = vmatprep.subr.mxu0 0.0
    %228 = vmatpush1.msra.mxu0 0.0
    %229 = vmatprep.subr.mxu0 0.0
    %230 = vmatpush1.msra.mxu0 0.0
    %231 = vmatprep.subr.mxu0 0.0
    %232 = vmatpush1.msra.mxu0 0.0
    %233 = vmatprep.subr.mxu0 0.0
    %234 = vmatpush1.msra.mxu0 0.0
    %235 = vmatprep.subr.mxu0 0.0
    %236 = vmatpush1.msra.mxu0 0.0
    %237 = vmatprep.subr.mxu0 0.0
    %238 = vmatpush1.msra.mxu0 0.0
    %239 = vmatprep.subr.mxu0 0.0
    %240 = vmatpush1.msra.mxu0 0.0
    %241 = vmatprep.subr.mxu0 0.0
    %242 = vmatpush1.msra.mxu0 0.0
    %243 = vmatprep.subr.mxu0 0.0
    %244 = vmatpush1.msra.mxu0 0.0
    %245 = vmatprep.subr.mxu0 0.0
    %246 = vmatpush1.msra.mxu0 0.0
    %247 = vmatprep.subr.mxu0 0.0
    %248 = vmatpush1.msra.mxu0 0.0
    %249 = vmatprep.subr.mxu0 0.0
    %250 = vmatpush1.msra.mxu0 0.0
    %251 = vmatprep.subr.mxu0 0.0
    %252 = vmatpush1.msra.mxu0 0.0
    %253 = vmatprep.subr.mxu0 0.0
    %254 = vmatpush1.msra.mxu0 0.0
    %255 = vmatprep.subr.mxu0 0.0
    %256 = vmatpush1.msra.mxu0 0.0
    %257 = vmatprep.subr.mxu0 0.0
    %258 = vmatpush1.msra.mxu0 0.0
    %259 = vmatprep.subr.mxu0 0.0
    %260 = vmatpush1.msra.mxu0 0.0
    %261 = vmatprep.subr.mxu0 0.0
    %262 = vmatpush1.msra.mxu0 0.0
    %263 = vmatprep.subr.mxu0 0.0
    %264 = vmatpush1.msra.mxu0 0.0
    %265 = vmatprep.subr.mxu0 0.0
    %266 = vmatpush1.msra.mxu0 0.0
    %267 = vmatprep.subr.mxu0 0.0
    %268 = vmatpush1.msra.mxu0 0.0
    %269 = vmatprep.subr.mxu0 0.0
    %270 = vmatpush1.msra.mxu0 0.0
    %271 = vmatprep.subr.mxu0 0.0
    %272 = vmatpush1.msra.mxu0 0.0
    %273 = vmatprep.subr.mxu0 0.0
    %274 = vmatpush1.msra.mxu0 0.0
    %275 = vmatprep.mubr.f32.mxu0 0.0
    %276 = vmatmul.mubr.f32.gmra.mrb[0].mxu0 %v209
    %v277 = vpop.f32.mrb[0].mxu0
    %v278 = vadd.f32 %v206, %v277
    %v279 = vpop.f32.mrb[0].mxu0
    %280 = vdwg.mxu0
    %v281 = vld [vmem:[#allocation11] sm:$0xff]
    %v282 = vld [vmem:[#allocation11 + $0x8] sm:$0xff]
    %v283 = vld [vmem:[#allocation11 + $0x10] sm:$0xff]
    %v284 = vld [vmem:[#allocation11 + $0x18] sm:$0xff]
    %v285 = vld [vmem:[%s8] sm:$0x1]
    %v287 = vlaneseq
    %v288 = vshrl.u32 %v287, 7
    %v289 = vsub.s32 0, %v288
    %v290 = vrot.slane %v285, %v289
    %v293 = vsel %vm123, %v111, 0
    %295 = vmatprep.subr.mxu0 0.0
    %296 = vmatpush1.msra.mxu0 %v281
    %297 = vmatprep.subr.mxu0 0.0
    %298 = vmatpush1.msra.mxu0 %v282
    %299 = vmatprep.subr.mxu0 0.0
    %300 = vmatpush1.msra.mxu0 %v283
    %301 = vmatprep.subr.mxu0 0.0
    %302 = vmatpush1.msra.mxu0 %v284
    %303 = vmatprep.subr.mxu0 0.0
    %304 = vmatpush1.msra.mxu0 0.0
    %305 = vmatprep.subr.mxu0 0.0
    %306 = vmatpush1.msra.mxu0 0.0
    %307 = vmatprep.subr.mxu0 0.0
    %308 = vmatpush1.msra.mxu0 0.0
    %309 = vmatprep.subr.mxu0 0.0
    %310 = vmatpush1.msra.mxu0 0.0
    %311 = vmatprep.subr.mxu0 0.0
    %312 = vmatpush1.msra.mxu0 0.0
    %313 = vmatprep.subr.mxu0 0.0
    %314 = vmatpush1.msra.mxu0 0.0
    %315 = vmatprep.subr.mxu0 0.0
    %316 = vmatpush1.msra.mxu0 0.0
    %317 = vmatprep.subr.mxu0 0.0
    %318 = vmatpush1.msra.mxu0 0.0
    %319 = vmatprep.subr.mxu0 0.0
    %320 = vmatpush1.msra.mxu0 0.0
    %321 = vmatprep.subr.mxu0 0.0
    %322 = vmatpush1.msra.mxu0 0.0
    %323 = vmatprep.subr.mxu0 0.0
    %324 = vmatpush1.msra.mxu0 0.0
    %325 = vmatprep.subr.mxu0 0.0
    %326 = vmatpush1.msra.mxu0 0.0
    %327 = vmatprep.subr.mxu0 0.0
    %328 = vmatpush1.msra.mxu0 0.0
    %329 = vmatprep.subr.mxu0 0.0
    %330 = vmatpush1.msra.mxu0 0.0
    %331 = vmatprep.subr.mxu0 0.0
    %332 = vmatpush1.msra.mxu0 0.0
    %333 = vmatprep.subr.mxu0 0.0
    %334 = vmatpush1.msra.mxu0 0.0
    %335 = vmatprep.subr.mxu0 0.0
    %336 = vmatpush1.msra.mxu0 0.0
    %337 = vmatprep.subr.mxu0 0.0
    %338 = vmatpush1.msra.mxu0 0.0
    %339 = vmatprep.subr.mxu0 0.0
    %340 = vmatpush1.msra.mxu0 0.0
    %341 = vmatprep.subr.mxu0 0.0
    %342 = vmatpush1.msra.mxu0 0.0
    %343 = vmatprep.subr.mxu0 0.0
    %344 = vmatpush1.msra.mxu0 0.0
    %345 = vmatprep.subr.mxu0 0.0
    %346 = vmatpush1.msra.mxu0 0.0
    %347 = vmatprep.subr.mxu0 0.0
    %348 = vmatpush1.msra.mxu0 0.0
    %349 = vmatprep.subr.mxu0 0.0
    %350 = vmatpush1.msra.mxu0 0.0
    %351 = vmatprep.subr.mxu0 0.0
    %352 = vmatpush1.msra.mxu0 0.0
    %353 = vmatprep.subr.mxu0 0.0
    %354 = vmatpush1.msra.mxu0 0.0
    %355 = vmatprep.subr.mxu0 0.0
    %356 = vmatpush1.msra.mxu0 0.0
    %357 = vmatprep.subr.mxu0 0.0
    %358 = vmatpush1.msra.mxu0 0.0
    %359 = vmatprep.mubr.f32.mxu0 0.0
    %360 = vmatmul.mubr.f32.gmra.mrb[0].mxu0 %v293
    %v361 = vpop.f32.mrb[0].mxu0
    %v362 = vadd.f32 %v290, %v361
    %v363 = vpop.f32.mrb[0].mxu0
    %364 = vdwg.mxu0
    %365 = vmatprep.subr.mxu0 0.0
    %366 = vmatpush1.xpose.msra.mxu0 %v278
    %367 = vmatprep.subr.mxu0 0.0
    %368 = vmatpush1.xpose.msra.mxu0 0.0
    %369 = vmatprep.subr.mxu0 0.0
    %370 = vmatpush1.xpose.msra.mxu0 0.0
    %371 = vmatprep.subr.mxu0 0.0
    %372 = vmatpush1.xpose.msra.mxu0 0.0
    %373 = vmatprep.subr.mxu0 0.0
    %374 = vmatpush1.xpose.msra.mxu0 0.0
    %375 = vmatprep.subr.mxu0 0.0
    %376 = vmatpush1.xpose.msra.mxu0 0.0
    %377 = vmatprep.subr.mxu0 0.0
    %378 = vmatpush1.xpose.msra.mxu0 0.0
    %379 = vmatprep.subr.mxu0 0.0
    %380 = vmatpush1.xpose.msra.mxu0 0.0
    %381 = vmatprep.subr.mxu0 0.0
    %382 = vmatpush1.xpose.msra.mxu0 0.0
    %383 = vmatprep.subr.mxu0 0.0
    %384 = vmatpush1.xpose.msra.mxu0 0.0
    %385 = vmatprep.subr.mxu0 0.0
    %386 = vmatpush1.xpose.msra.mxu0 0.0
    %387 = vmatprep.subr.mxu0 0.0
    %388 = vmatpush1.xpose.msra.mxu0 0.0
    %389 = vmatprep.subr.mxu0 0.0
    %390 = vmatpush1.xpose.msra.mxu0 0.0
    %391 = vmatprep.subr.mxu0 0.0
    %392 = vmatpush1.xpose.msra.mxu0 0.0
    %393 = vmatprep.subr.mxu0 0.0
    %394 = vmatpush1.xpose.msra.mxu0 0.0
    %395 = vmatprep.subr.mxu0 0.0
    %396 = vmatpush1.xpose.msra.mxu0 0.0
    %397 = vmatprep.subr.mxu0 0.0
    %398 = vmatpush1.xpose.msra.mxu0 0.0
    %399 = vmatprep.subr.mxu0 0.0
    %400 = vmatpush1.xpose.msra.mxu0 0.0
    %401 = vmatprep.subr.mxu0 0.0
    %402 = vmatpush1.xpose.msra.mxu0 0.0
    %403 = vmatprep.subr.mxu0 0.0
    %404 = vmatpush1.xpose.msra.mxu0 0.0
    %405 = vmatprep.subr.mxu0 0.0
    %406 = vmatpush1.xpose.msra.mxu0 0.0
    %407 = vmatprep.subr.mxu0 0.0
    %408 = vmatpush1.xpose.msra.mxu0 0.0
    %409 = vmatprep.subr.mxu0 0.0
    %410 = vmatpush1.xpose.msra.mxu0 0.0
    %411 = vmatprep.subr.mxu0 0.0
    %412 = vmatpush1.xpose.msra.mxu0 0.0
    %413 = vmatprep.subr.mxu0 0.0
    %414 = vmatpush1.xpose.msra.mxu0 0.0
    %415 = vmatprep.subr.mxu0 0.0
    %416 = vmatpush1.xpose.msra.mxu0 0.0
    %417 = vmatprep.subr.mxu0 0.0
    %418 = vmatpush1.xpose.msra.mxu0 0.0
    %419 = vmatprep.subr.mxu0 0.0
    %420 = vmatpush1.xpose.msra.mxu0 0.0
    %421 = vmatprep.subr.mxu0 0.0
    %422 = vmatpush1.xpose.msra.mxu0 0.0
    %423 = vmatprep.subr.mxu0 0.0
    %424 = vmatpush1.xpose.msra.mxu0 0.0
    %425 = vmatprep.subr.mxu0 0.0
    %426 = vmatpush1.xpose.msra.mxu0 0.0
    %427 = vmatprep.subr.mxu0 0.0
    %428 = vmatpush1.xpose.msra.mxu0 0.0
    %429 = vmatprep.mubr.f32.mxu0 0.0
    %430 = vmatmul.mubr.f32.gmra.mrb[0].mxu0 %v194
    %v431 = vpop.f32.mrb[0].mxu0
    %v432 = vadd.f32 0.0, %v431
    %v433 = vpop.f32.mrb[0].mxu0
    %434 = vdwg.mxu0
    %v435 = vmul.f32 %v432, 0.25
    %vm436 = vcmask 64512
    %v437 = vsel %vm436, %v435, -inf
    %438 = vmax.xlane.f32.xlu0 %v437
    %v439 = vpop.xlane.xlu0 %438
    %v440 = vsub.f32 %v435, %v439
    %v441 = vmul.f32 %v440, 1.442695
    %v442 = vpow.pop %v441
    %v443 = vsel %vm436, %v442, 0.0
    %444 = vadd.xlane.f32.xlu0 %v443
    %v445 = vpop.xlane.xlu0 %444
    %v446 = vrcp.pop %v445
    %v447 = vmul.f32 %v442, %v446
    %v449 = vsel %vm436, %v447, 0
    %451 = vmatprep.subr.mxu0 0.0
    %452 = vmatpush1.msra.mxu0 %v362
    %453 = vmatprep.subr.mxu0 0.0
    %454 = vmatpush1.msra.mxu0 0.0
    %455 = vmatprep.subr.mxu0 0.0
    %456 = vmatpush1.msra.mxu0 0.0
    %457 = vmatprep.subr.mxu0 0.0
    %458 = vmatpush1.msra.mxu0 0.0
    %459 = vmatprep.subr.mxu0 0.0
    %460 = vmatpush1.msra.mxu0 0.0
    %461 = vmatprep.subr.mxu0 0.0
    %462 = vmatpush1.msra.mxu0 0.0
    %463 = vmatprep.subr.mxu0 0.0
    %464 = vmatpush1.msra.mxu0 0.0
    %465 = vmatprep.subr.mxu0 0.0
    %466 = vmatpush1.msra.mxu0 0.0
    %467 = vmatprep.subr.mxu0 0.0
    %468 = vmatpush1.msra.mxu0 0.0
    %469 = vmatprep.subr.mxu0 0.0
    %470 = vmatpush1.msra.mxu0 0.0
    %471 = vmatprep.subr.mxu0 0.0
    %472 = vmatpush1.msra.mxu0 0.0
    %473 = vmatprep.subr.mxu0 0.0
    %474 = vmatpush1.msra.mxu0 0.0
    %475 = vmatprep.subr.mxu0 0.0
    %476 = vmatpush1.msra.mxu0 0.0
    %477 = vmatprep.subr.mxu0 0.0
    %478 = vmatpush1.msra.mxu0 0.0
    %479 = vmatprep.subr.mxu0 0.0
    %480 = vmatpush1.msra.mxu0 0.0
    %481 = vmatprep.subr.mxu0 0.0
    %482 = vmatpush1.msra.mxu0 0.0
    %483 = vmatprep.subr.mxu0 0.0
    %484 = vmatpush1.msra.mxu0 0.0
    %485 = vmatprep.subr.mxu0 0.0
    %486 = vmatpush1.msra.mxu0 0.0
    %487 = vmatprep.subr.mxu0 0.0
    %488 = vmatpush1.msra.mxu0 0.0
    %489 = vmatprep.subr.mxu0 0.0
    %490 = vmatpush1.msra.mxu0 0.0
    %491 = vmatprep.subr.mxu0 0.0
    %492 = vmatpush1.msra.mxu0 0.0
    %493 = vmatprep.subr.mxu0 0.0
    %494 = vmatpush1.msra.mxu0 0.0
    %495 = vmatprep.subr.mxu0 0.0
    %496 = vmatpush1.msra.mxu0 0.0
    %497 = vmatprep.subr.mxu0 0.0
    %498 = vmatpush1.msra.mxu0 0.0
    %499 = vmatprep.subr.mxu0 0.0
    %500 = vmatpush1.msra.mxu0 0.0
    %501 = vmatprep.subr.mxu0 0.0
    %502 = vmatpush1.msra.mxu0 0.0
    %503 = vmatprep.subr.mxu0 0.0
    %504 = vmatpush1.msra.mxu0 0.0
    %505 = vmatprep.subr.mxu0 0.0
    %506 = vmatpush1.msra.mxu0 0.0
    %507 = vmatprep.subr.mxu0 0.0
    %508 = vmatpush1.msra.mxu0 0.0
    %509 = vmatprep.subr.mxu0 0.0
    %510 = vmatpush1.msra.mxu0 0.0
    %511 = vmatprep.subr.mxu0 0.0
    %512 = vmatpush1.msra.mxu0 0.0
    %513 = vmatprep.subr.mxu0 0.0
    %514 = vmatpush1.msra.mxu0 0.0
    %515 = vmatprep.mubr.f32.mxu0 0.0
    %516 = vmatmul.mubr.f32.gmra.mrb[0].mxu0 %v449
    %v517 = vpop.f32.mrb[0].mxu0
    %v518 = vadd.f32 0.0, %v517
    %v519 = vpop.f32.mrb[0].mxu0
    %520 = vdwg.mxu0
    %521 = vst [vmem:[#allocation13] sm:$0xff] %v518
    // Predicated region
    $region62: #{tpu_custom_call.1} parent=1 // pred_check
      _
    $region63: #{tpu_custom_call.1} parent=1 // pred_check_branch
      %523 = sbr.rel (0) target = $region65
    $region64: #{tpu_custom_call.1} parent=1 // pred_region
      %s525 = ssub.s32 128, 128
      %526 = vsyncadd [#allocation4], %s525
      %s528 = sshll.u32 [#allocation13], 4
      %s529 = int_to_ptr.vmem [resolvable:$true] %s528
      %531 = dma.vmem_to_hbm [thread:$0]  %s529, 128, %s9, [#allocation4]
    $region65: #{tpu_custom_call.1} parent=1 // pred_fallthru
      _
    // Predicated region
    $region66: #{tpu_custom_call.1} parent=1 // pred_check
      _
    $region67: #{tpu_custom_call.1} parent=1 // pred_check_branch
      %533 = sbr.rel (0) target = $region69
    $region68: #{tpu_custom_call.1} parent=1 // pred_region
      %534 = dma.done [#allocation4], 128
    $region69: #{tpu_custom_call.1} parent=1 // pred_fallthru
      _
    %535 = vsyncpa [#allocation3], 1
    %536 = vsyncpa [#allocation6], 1
    %537 = vsyncpa [#allocation9], 1
    %538 = vsyncpa [#allocation12], 1
    %539 = vsyncpa [#allocation4], 1

</llo_original>
